<compile_context>
chip_gen: v7x
topology: tpu7x:2x2x1
jax: 0.10.0
libtpu: 0.0.40
codegen_flags: <defaults>
</compile_context>

<pallas_src>
import functools

import jax
import jax.numpy as jnp
from jax import lax
from jax.experimental import pallas as pl
from jax.experimental.pallas import tpu as pltpu


def _label_smoothing_kernel(target_ref, pred_ref, out_ref, *,
                            n_rows, row_tile, classes, padding_idx, smoothing):
    """One grid step: (row_tile, C) logits -> one scalar partial loss sum."""
    pred = pred_ref[...].astype(jnp.float32)              # (TN, C)
    tgt = target_ref[...]                                  # (TN, 1) int32

    # Shared-exp softmax / log_softmax along the class (lane) dim.
    m = jnp.max(pred, axis=-1, keepdims=True)              # (TN, 1)
    z = pred - m                                            # (TN, C)
    e = jnp.exp(z)                                          # (TN, C)
    s = jnp.sum(e, axis=-1, keepdims=True)                  # (TN, 1)
    inv_s = pl.reciprocal(s, approx=True)                   # EUP slot (~free)
    inv_s = inv_s * (2.0 - s * inv_s)                       # 1 Newton step, (TN,1) only
    prob = e * inv_s                                         # softmax(pred, dim=1)
    logp = z - jnp.log(s)                                    # log_softmax(pred, dim=-1)
    rev = 1.0 - prob                                         # reverse_prob

    # Weighted log-prob; the factor 2 from "2 * rev**2" is folded into the constants.
    lw = logp * (rev * rev)                                  # (TN, C)

    conf2 = 2.0 * (1.0 - smoothing)
    smooth2 = 2.0 * smoothing / (classes - 2)

    col = lax.broadcasted_iota(jnp.int32, lw.shape, 1)       # (TN, C) class ids
    tgt_lw = jnp.sum(jnp.where(col == tgt, lw, 0.0),
                     axis=-1, keepdims=True)                 # lw[i, tgt[i]]   (TN, 1)
    sum_lw = jnp.sum(lw, axis=-1, keepdims=True)             # sum_c lw        (TN, 1)
    pad_lw = lw[:, padding_idx:padding_idx + 1]              # lw[:, pad]      (TN, 1)

    #   sum_c true_dist*lw*2 = smooth2*(sum_lw - pad_lw - tgt_lw) + conf2*tgt_lw
    row_loss = -(smooth2 * (sum_lw - pad_lw - tgt_lw) + conf2 * tgt_lw)   # (TN, 1)

    # Mask (a) rows whose target == padding_idx (zero contribution per the module)
    # and (b) the out-of-bounds tail of the last (ragged) grid block.  An elementwise
    # where on already-computed values is NaN-safe even if tail rows held garbage.
    row_ids = (pl.program_id(0) * row_tile
               + lax.broadcasted_iota(jnp.int32, row_loss.shape, 0))
    valid = jnp.logical_and(row_ids < n_rows, tgt != padding_idx)
    row_loss = jnp.where(valid, row_loss, 0.0)

    # One partial sum per grid block (sublane reduce on the otherwise-idle XLU).
    out_ref[...] = jnp.sum(row_loss, axis=0, keepdims=True).reshape(1, 1, 1)


def _choose_row_tile(n_rows, classes, in_itemsize, vmem_limit_bytes):
    """Largest sublane-aligned row tile fitting a conservative VMEM budget."""
    budget = (vmem_limit_bytes * 3) // 4            # leave scheduler / scratch headroom
    per_row = (2 * classes * in_itemsize            # pred tile, double-buffered
               + 2 * 128 * 4                        # (TN,1) int32 target, 128-lane padded, x2
               + 4 * classes * 4)                   # ~4 live full-width f32 temporaries
    rt = budget // per_row
    rt = (rt // 8) * 8                              # sublane alignment
    # Keep >= 2 grid blocks when possible so v7x's second TensorCore gets work.
    half = (((n_rows + 1) // 2) + 7) // 8 * 8
    rt = min(rt, max(8, half))
    rt = min(rt, 32768)                             # sanity cap
    return int(max(8, rt))


def label_smoothing_loss(pred, target, *, classes, padding_idx, smoothing=0.0,
                         row_tile=None, vmem_limit_bytes=32 * 1024 * 1024):
    """pred: (N, C) float logits; target: (N,) int labels. Returns scalar loss."""
    N, C = pred.shape
    assert C == classes
    assert classes > 2, "smoothing / (classes - 2) requires classes > 2"

    if row_tile is None:
        row_tile = _choose_row_tile(N, C, jnp.dtype(pred.dtype).itemsize,
                                    vmem_limit_bytes)
    assert row_tile % 8 == 0

    target_col = target.astype(jnp.int32).reshape(N, 1)
    num_blocks = pl.cdiv(N, row_tile)               # ragged tail is masked in-kernel

    # TODO(synk): for C < 128 only C of 128 lanes carry data per vreg; a lane-packing
    # variant (pack 128//C rows per vreg row with segmented lane reductions) would
    # recover the wasted VPU/EUP throughput for small class counts.

    kernel = functools.partial(
        _label_smoothing_kernel,
        n_rows=N, row_tile=row_tile, classes=classes,
        padding_idx=padding_idx, smoothing=smoothing)

    block_sums = pl.pallas_call(
        kernel,
        out_shape=jax.ShapeDtypeStruct((num_blocks, 1, 1), jnp.float32),
        grid_spec=pltpu.PrefetchScalarGridSpec(
            num_scalar_prefetch=0,
            grid=(num_blocks,),
            in_specs=[
                pl.BlockSpec((row_tile, 1), lambda i: (i, 0)),   # target column (int32)
                pl.BlockSpec((row_tile, C), lambda i: (i, 0)),   # pred row-tile
            ],
            out_specs=pl.BlockSpec((1, 1, 1), lambda i: (i, 0, 0)),  # per-block sum
        ),
        compiler_params=pltpu.CompilerParams(
            dimension_semantics=("parallel",),      # independent row blocks
            vmem_limit_bytes=vmem_limit_bytes),
    )(target_col, pred)

    # torch.mean over the original N rows (masked rows contribute exactly 0).
    return jnp.sum(block_sums) / N


def _reference(pred, target, *, classes, padding_idx, smoothing):
    """Pure-JAX reference mirroring the PyTorch forward."""
    prob = jax.nn.softmax(pred, axis=1)
    rev = 1.0 - prob
    logp = jax.nn.log_softmax(pred, axis=-1)
    confidence = 1.0 - smoothing
    true_dist = jnp.full_like(pred, smoothing / (classes - 2))
    true_dist = true_dist.at[jnp.arange(pred.shape[0]), target].set(confidence)
    true_dist = true_dist.at[:, padding_idx].set(0.0)
    true_dist = jnp.where((target == padding_idx)[:, None], 0.0, true_dist)
    return jnp.mean(jnp.sum(-true_dist * logp * (2.0 * rev ** 2), axis=-1))


if __name__ == "__main__":
    classes = 16
    padding_idx = 0
    smoothing = 0.1

    key = jax.random.PRNGKey(0)
    k1, k2, k3, k4 = jax.random.split(key, 4)

    # Case 1: small batch, auto row_tile (2 small blocks; exercises padding-row mask).
    N1 = 16
    pred1 = jax.random.normal(k1, (N1, classes), dtype=jnp.float32)
    target1 = jax.random.randint(k2, (N1,), 0, classes, dtype=jnp.int32)
    target1 = target1.at[3].set(padding_idx).at[7].set(padding_idx)

    loss1 = label_smoothing_loss(
        pred1, target1, classes=classes, padding_idx=padding_idx, smoothing=smoothing)
    loss1 = jax.block_until_ready(loss1)
    ref1 = _reference(pred1, target1, classes=classes,
                      padding_idx=padding_idx, smoothing=smoothing)

    # Case 2: ragged batch with explicit row_tile=128 -> 3 grid blocks, last one
    # partial (44 valid rows) -> exercises the in-kernel tail masking (no jnp.pad).
    N2 = 300
    pred2 = jax.random.normal(k3, (N2, classes), dtype=jnp.float32)
    target2 = jax.random.randint(k4, (N2,), 0, classes, dtype=jnp.int32)
    target2 = target2.at[0].set(padding_idx).at[123].set(padding_idx)

    loss2 = label_smoothing_loss(
        pred2, target2, classes=classes, padding_idx=padding_idx,
        smoothing=smoothing, row_tile=128)
    loss2 = jax.block_until_ready(loss2)
    ref2 = _reference(pred2, target2, classes=classes,
                      padding_idx=padding_idx, smoothing=smoothing)

    # Tolerance tightened vs. v2: the Newton-refined reciprocal is ~f32-accurate.
    assert jnp.allclose(loss1, ref1, rtol=1e-3, atol=1e-3), (loss1, ref1)
    assert jnp.allclose(loss2, ref2, rtol=1e-3, atol=1e-3), (loss2, ref2)

    print("KERNEL_OK")
</pallas_src>

<mosaic_0001>
module attributes {stable_mosaic.version = 11 : i64} {
  func.func @_label_smoothing_kernel(%arg0: i32, %arg1: memref<8x1xi32, #tpu.memory_space<vmem>>, %arg2: memref<8x16xf32, #tpu.memory_space<vmem>>, %arg3: memref<1x1x1xf32, #tpu.memory_space<vmem>>) attributes {dimension_semantics = [#tpu.dimension_semantics<parallel>], iteration_bounds = array<i64: 2>, scalar_prefetch = 0 : i64, scratch_operands = 0 : i64, tpu.core_type = #tpu.core_type<tc>, window_params = [{transform_indices = @transform_0, window_bounds = array<i64: 8, 1>}, {transform_indices = @transform_1, window_bounds = array<i64: 8, 16>}, {transform_indices = @transform_2, window_bounds = array<i64: 1, 1, 1>}]} {
    %c0 = arith.constant 0 : index
    %c0_0 = arith.constant 0 : index
    %0 = vector.load %arg2[%c0, %c0_0] : memref<8x16xf32, #tpu.memory_space<vmem>>, vector<8x16xf32>
    %c0_1 = arith.constant 0 : index
    %c0_2 = arith.constant 0 : index
    %1 = vector.load %arg1[%c0_1, %c0_2] : memref<8x1xi32, #tpu.memory_space<vmem>>, vector<8x1xi32>
    %cst = arith.constant dense<0xFF800000> : vector<8xf32>
    %2 = vector.multi_reduction <maximumf>, %0, %cst [1] : vector<8x16xf32> to vector<8xf32>
    %3 = vector.shape_cast %2 : vector<8xf32> to vector<8x1xf32>
    %4 = vector.broadcast %3 : vector<8x1xf32> to vector<8x16xf32>
    %5 = arith.subf %0, %4 : vector<8x16xf32>
    %6 = math.exp %5 : vector<8x16xf32>
    %cst_3 = arith.constant dense<0.000000e+00> : vector<8xf32>
    %7 = vector.multi_reduction <add>, %6, %cst_3 [1] : vector<8x16xf32> to vector<8xf32>
    %8 = vector.shape_cast %7 : vector<8xf32> to vector<8x1xf32>
    %9 = tpu.reciprocal %8 {approx = true} : vector<8x1xf32> -> vector<8x1xf32>
    %10 = arith.mulf %8, %9 : vector<8x1xf32>
    %cst_4 = arith.constant 2.000000e+00 : f32
    %11 = vector.broadcast %cst_4 : f32 to vector<8x1xf32>
    %12 = arith.subf %11, %10 : vector<8x1xf32>
    %13 = arith.mulf %9, %12 : vector<8x1xf32>
    %14 = vector.broadcast %13 : vector<8x1xf32> to vector<8x16xf32>
    %15 = arith.mulf %6, %14 : vector<8x16xf32>
    %16 = math.log %8 : vector<8x1xf32>
    %17 = vector.broadcast %16 : vector<8x1xf32> to vector<8x16xf32>
    %18 = arith.subf %5, %17 : vector<8x16xf32>
    %cst_5 = arith.constant 1.000000e+00 : f32
    %19 = vector.broadcast %cst_5 : f32 to vector<8x16xf32>
    %20 = arith.subf %19, %15 : vector<8x16xf32>
    %21 = arith.mulf %20, %20 : vector<8x16xf32>
    %22 = arith.mulf %18, %21 : vector<8x16xf32>
    %23 = tpu.iota {dimensions = array<i32: 1>} : vector<8x16xi32>
    %24 = vector.broadcast %1 : vector<8x1xi32> to vector<8x16xi32>
    %25 = arith.cmpi eq, %23, %24 : vector<8x16xi32>
    %cst_6 = arith.constant 0.000000e+00 : f32
    %26 = vector.broadcast %cst_6 : f32 to vector<8x16xf32>
    %27 = arith.select %25, %22, %26 : vector<8x16xi1>, vector<8x16xf32>
    %cst_7 = arith.constant dense<0.000000e+00> : vector<8xf32>
    %28 = vector.multi_reduction <add>, %27, %cst_7 [1] : vector<8x16xf32> to vector<8xf32>
    %29 = vector.shape_cast %28 : vector<8xf32> to vector<8x1xf32>
    %cst_8 = arith.constant dense<0.000000e+00> : vector<8xf32>
    %30 = vector.multi_reduction <add>, %22, %cst_8 [1] : vector<8x16xf32> to vector<8xf32>
    %31 = vector.shape_cast %30 : vector<8xf32> to vector<8x1xf32>
    %32 = vector.extract_strided_slice %22 {offsets = [0, 0], sizes = [8, 1], strides = [1, 1]} : vector<8x16xf32> to vector<8x1xf32>
    %33 = arith.subf %31, %32 : vector<8x1xf32>
    %34 = arith.subf %33, %29 : vector<8x1xf32>
    %cst_9 = arith.constant 0.0142857144 : f32
    %35 = vector.broadcast %cst_9 : f32 to vector<8x1xf32>
    %36 = arith.mulf %35, %34 : vector<8x1xf32>
    %cst_10 = arith.constant 1.800000e+00 : f32
    %37 = vector.broadcast %cst_10 : f32 to vector<8x1xf32>
    %38 = arith.mulf %37, %29 : vector<8x1xf32>
    %39 = arith.addf %36, %38 : vector<8x1xf32>
    %cst_11 = arith.constant 0.000000e+00 : f32
    %40 = vector.broadcast %cst_11 : f32 to vector<8x1xf32>
    %41 = arith.subf %40, %39 : vector<8x1xf32>
    %c8_i32 = arith.constant 8 : i32
    %42 = arith.muli %arg0, %c8_i32 : i32
    %43 = tpu.iota {dimensions = array<i32: 0>} : vector<8x1xi32>
    %44 = vector.broadcast %42 : i32 to vector<8x1xi32>
    %45 = arith.addi %44, %43 : vector<8x1xi32>
    %c16_i32 = arith.constant 16 : i32
    %46 = vector.broadcast %c16_i32 : i32 to vector<8x1xi32>
    %47 = arith.cmpi slt, %45, %46 : vector<8x1xi32>
    %c0_i32 = arith.constant 0 : i32
    %48 = vector.broadcast %c0_i32 : i32 to vector<8x1xi32>
    %49 = arith.cmpi ne, %1, %48 : vector<8x1xi32>
    %50 = arith.andi %47, %49 : vector<8x1xi1>
    %cst_12 = arith.constant 0.000000e+00 : f32
    %51 = vector.broadcast %cst_12 : f32 to vector<8x1xf32>
    %52 = arith.select %50, %41, %51 : vector<8x1xi1>, vector<8x1xf32>
    %cst_13 = arith.constant dense<0.000000e+00> : vector<1xf32>
    %53 = vector.multi_reduction <add>, %52, %cst_13 [0] : vector<8x1xf32> to vector<1xf32>
    %54 = vector.shape_cast %53 : vector<1xf32> to vector<1x1xf32>
    %55 = vector.shape_cast %54 : vector<1x1xf32> to vector<1x1x1xf32>
    %c0_14 = arith.constant 0 : index
    %c0_15 = arith.constant 0 : index
    %c0_16 = arith.constant 0 : index
    %56 = vector.load %arg3[%c0_14, %c0_15, %c0_16] : memref<1x1x1xf32, #tpu.memory_space<vmem>>, vector<1x1x1xf32>
    tpu.vector_store %arg3[%c0_14, %c0_15, %c0_16], %55 {strides = array<i32>} : memref<1x1x1xf32, #tpu.memory_space<vmem>>, vector<1x1x1xf32>,
    return
  }
  func.func @transform_0(%arg0: i32) -> (i32, i32) {
    %c0_i32 = arith.constant 0 : i32
    %c0_i32_0 = arith.constant 0 : i32
    return %arg0, %c0_i32 : i32, i32
  }
  func.func @transform_1(%arg0: i32) -> (i32, i32) {
    %c0_i32 = arith.constant 0 : i32
    %c0_i32_0 = arith.constant 0 : i32
    return %arg0, %c0_i32 : i32, i32
  }
  func.func @transform_2(%arg0: i32) -> (i32, i32, i32) {
    %c0_i32 = arith.constant 0 : i32
    %c0_i32_0 = arith.constant 0 : i32
    %c0_i32_1 = arith.constant 0 : i32
    return %arg0, %c0_i32, %c0_i32_0 : i32, i32, i32
  }
}

</mosaic_0001>

<llo_original>
// kernel: tpu_custom_call.1
$region0: #{tpu_custom_call.1}
  #allocation0 [shape = 'u32[]', space=smem, size = 0x4, offset = 0x4, fixed_abs, tag = 'smem constant byte address 0x4 - core index']
  #allocation1 [shape = 'u32[144,128]{1,0:T(1,128)}', space=vmem, size = 0x12000, scoped, tag = 'internal scratch']
  %s0 = inlined_call_operand.vmem [shape: s32[16,1], index: 0, kind: input, shape index: {}]
  %s1 = inlined_call_operand.vmem [shape: f32[16,16], index: 1, kind: input, shape index: {}]
  %s2 = inlined_call_operand.vmem [shape: f32[2,1,1], index: 2, kind: output, shape index: {}]
  %s3 = sld [smem:[#allocation0]]
  $region41: #{tpu_custom_call.1} parent=0
    _
  %s5 = ssub.s32 1, %s3
  %s6 = scalar_select 0, %s5, %s3
  loop: start=0, step=1, limit=4
  $region2: #{tpu_custom_call.1} parent=0 // loop_pre_header
    _
  $region3: #{tpu_custom_call.1} parent=0 // loop_header
    %s8 = sphi 0, %s12
    %p9 = scmp.ge.s32.totalorder %s8, 4
    %s18 = sphi 0, %s20
    %s21 = sphi 0, %s18
    %s22 = sphi 0, %s21
    %s38 = sphi 0, %s22
    %s44 = sphi 0, %s46
    %s47 = sphi 0, %s44
    %s48 = sphi 0, %s47
    %s64 = sphi 0, %s48
    %s70 = sphi 0, %s72
    %s73 = sphi 0, %s70
    %s74 = sphi 0, %s73
    %s90 = sphi 0, %s74
  $region4: #{tpu_custom_call.1} parent=0 // loop_header_branch
    %11 = sbr.rel (%p9) target = $region8
  $region5: #{tpu_custom_call.1} parent=0 // loop_body
    %s13 = ssub.s32 %s8, 1
    %s14 = ssub.s32 %s8, 2
    %s15 = sadd.s32 %s8, 1
    %s16 = ssub.s32 %s8, %s15
    %p17 = scmp.eq.s32.totalorder %s16, 0
    %s19 = sadd.s32 %s18, 1
    %s20 = scalar_select %p17, %s18, %s19
    %p23 = pneg %p17
    %p24 = scmp.eq.s32.totalorder %s8, 1
    %p25 = por %p23, %p24
    %p26 = scmp.ne.s32.totalorder %s18, %s21
    %p27 = scmp.eq.s32.totalorder %s8, 0
    %p28 = por %p26, %p27
    %p29 = scmp.ne.s32.totalorder %s18, %s21
    %p30 = scmp.eq.s32.totalorder %s13, 1
    %p31 = por %p29, %p30
    %p32 = scmp.ne.s32.totalorder %s21, %s22
    %p33 = scmp.eq.s32.totalorder %s13, 0
    %p34 = por %p32, %p33
    %p35 = scmp.ne.s32.totalorder %s21, %s22
    %p36 = scmp.eq.s32.totalorder %s14, 1
    %p37 = por %p35, %p36
    %p39 = scmp.ne.s32.totalorder %s22, %s38
    %p40 = scmp.eq.s32.totalorder %s14, 0
    %p41 = por %p39, %p40
    %s42 = ssub.s32 %s8, %s15
    %p43 = scmp.eq.s32.totalorder %s42, 0
    %s45 = sadd.s32 %s44, 1
    %s46 = scalar_select %p43, %s44, %s45
    %p49 = pneg %p43
    %p50 = scmp.eq.s32.totalorder %s8, 1
    %p51 = por %p49, %p50
    %p52 = scmp.ne.s32.totalorder %s44, %s47
    %p53 = scmp.eq.s32.totalorder %s8, 0
    %p54 = por %p52, %p53
    %p55 = scmp.ne.s32.totalorder %s44, %s47
    %p56 = scmp.eq.s32.totalorder %s13, 1
    %p57 = por %p55, %p56
    %p58 = scmp.ne.s32.totalorder %s47, %s48
    %p59 = scmp.eq.s32.totalorder %s13, 0
    %p60 = por %p58, %p59
    %p61 = scmp.ne.s32.totalorder %s47, %s48
    %p62 = scmp.eq.s32.totalorder %s14, 1
    %p63 = por %p61, %p62
    %p65 = scmp.ne.s32.totalorder %s48, %s64
    %p66 = scmp.eq.s32.totalorder %s14, 0
    %p67 = por %p65, %p66
    %s68 = ssub.s32 %s8, %s15
    %p69 = scmp.eq.s32.totalorder %s68, 0
    %s71 = sadd.s32 %s70, 1
    %s72 = scalar_select %p69, %s70, %s71
    %p75 = pneg %p69
    %p76 = scmp.eq.s32.totalorder %s8, 1
    %p77 = por %p75, %p76
    %p78 = scmp.ne.s32.totalorder %s70, %s73
    %p79 = scmp.eq.s32.totalorder %s8, 0
    %p80 = por %p78, %p79
    %p81 = scmp.ne.s32.totalorder %s70, %s73
    %p82 = scmp.eq.s32.totalorder %s13, 1
    %p83 = por %p81, %p82
    %p84 = scmp.ne.s32.totalorder %s73, %s74
    %p85 = scmp.eq.s32.totalorder %s13, 0
    %p86 = por %p84, %p85
    %p87 = scmp.ne.s32.totalorder %s73, %s74
    %p88 = scmp.eq.s32.totalorder %s14, 1
    %p89 = por %p87, %p88
    %p91 = scmp.ne.s32.totalorder %s74, %s90
    %p92 = scmp.eq.s32.totalorder %s14, 0
    %p93 = por %p91, %p92
    %p94 = scmp.le.s32.totalorder 1, %s8
    %p95 = scmp.lt.s32.totalorder %s8, 3
    %p96 = pnand %p94, %p95
    %p97 = pneg %p96
    // Predicated region
    $region9: #{tpu_custom_call.1} parent=5 // pred_check
      _
    $region10: #{tpu_custom_call.1} parent=5 // pred_check_branch
      %99 = sbr.rel (%p96) target = $region12
    $region11: #{tpu_custom_call.1} parent=5 // pred_region
      %s100 = ssub.s32 %s8, 1
    $region12: #{tpu_custom_call.1} parent=5 // pred_fallthru
      _
    %p101 = scmp.lt.s32.totalorder %s8, 2
    // Predicated region
    $region13: #{tpu_custom_call.1} parent=5 // pred_check
      %p102 = pneg %p101
    $region14: #{tpu_custom_call.1} parent=5 // pred_check_branch
      %104 = sbr.rel (%p102) target = $region16
    $region15: #{tpu_custom_call.1} parent=5 // pred_region
      // Predicated region
      $region17: #{tpu_custom_call.1} parent=15 // pred_check
        %p105 = pneg %p28
      $region18: #{tpu_custom_call.1} parent=15 // pred_check_branch
        %107 = sbr.rel (%p105) target = $region20
      $region19: #{tpu_custom_call.1} parent=15 // pred_region
        %p108 = scmp.lt.s32.totalorder %s8, 1
        %s109 = scalar_select %p108, %s8, 1
        %s110 = smul.addr %s109, 8
        %s111 = scalar_lea.vmem %s0, %s110
      $region20: #{tpu_custom_call.1} parent=15 // pred_fallthru
        _
      // Predicated region
      $region21: #{tpu_custom_call.1} parent=15 // pred_check
        %p112 = pneg %p54
      $region22: #{tpu_custom_call.1} parent=15 // pred_check_branch
        %114 = sbr.rel (%p112) target = $region24
      $region23: #{tpu_custom_call.1} parent=15 // pred_region
        %p115 = scmp.lt.s32.totalorder %s8, 1
        %s116 = scalar_select %p115, %s8, 1
        %s117 = smul.addr %s116, 8
        %s118 = scalar_lea.vmem %s1, %s117
      $region24: #{tpu_custom_call.1} parent=15 // pred_fallthru
        _
    $region16: #{tpu_custom_call.1} parent=5 // pred_fallthru
      _
    %p119 = scmp.le.s32.totalorder 1, %s8
    %p120 = scmp.lt.s32.totalorder %s8, 3
    %p121 = pnand %p119, %p120
    %p122 = pneg %p121
    // Predicated region
    $region25: #{tpu_custom_call.1} parent=5 // pred_check
      _
    $region26: #{tpu_custom_call.1} parent=5 // pred_check_branch
      %124 = sbr.rel (%p121) target = $region28
    $region27: #{tpu_custom_call.1} parent=5 // pred_region
      %s125 = ssub.s32 %s8, 1
      %p126 = scmp.lt.s32.totalorder %s13, 1
      %s127 = scalar_select %p126, %s13, 1
      %s128 = smul.addr %s127, 8
      %s129 = scalar_lea.vmem %s0, %s128
      %p130 = pneg %p34
      %p131 = pneg %p31
      %p132 = scmp.lt.s32.totalorder %s13, 1
      %s133 = scalar_select %p132, %s13, 1
      %s134 = smul.addr %s133, 8
      %s135 = scalar_lea.vmem %s1, %s134
      %p136 = pneg %p60
      %p137 = pneg %p57
      %p138 = pneg %p86
      %p139 = pneg %p83
      %p140 = scmp.lt.s32.totalorder %s13, 1
      %s141 = scalar_select %p140, %s13, 1
      %s142 = scalar_lea.vmem %s2, %s141
      %p143 = scmp.lt.s32.totalorder %s13, 1
      %s144 = scalar_select %p143, %s13, 1
      %s145 = smul.addr %s144, 8
      %s146 = scalar_lea.vmem %s0, %s145
      %p147 = scmp.lt.s32.totalorder %s13, 1
      %s148 = scalar_select %p147, %s13, 1
      %s149 = smul.addr %s148, 8
      %s150 = scalar_lea.vmem %s1, %s149
      %p151 = scmp.lt.s32.totalorder %s13, 1
      %s152 = scalar_select %p151, %s13, 1
      %s153 = scalar_lea.vmem %s2, %s152
      %v154 = vld [vmem:[%s150] sm:$0xff]
      %v155 = vld [vmem:[%s146] sm:$0xff]
      %vm156 = vcmask 130048
      %v157 = vsel %vm156, %v154, -inf
      %158 = vmax.xlane.f32.xlu0 %v157
      %v159 = vpop.xlane.xlu0 %158
      %v160 = vsub.f32 %v154, %v159
      %v161 = vmul.f32 %v160, 1.442695
      %v162 = vpow.pop %v161
      %v163 = vsel %vm156, %v162, 0.0
      %164 = vadd.xlane.f32.xlu0 %v163
      %v165 = vpop.xlane.xlu0 %164
      %v166 = vrcp.pop %v165
      %v167 = vmul.f32 %v165, %v166
      %v168 = vsub.f32 2.0, %v167
      %v169 = vmul.f32 %v166, %v168
      %v170 = vmul.f32 %v162, %v169
      %v171 = vlog2.pop %v165
      %v172 = vmul.f32 %v171, 0.6931472
      %v173 = vsub.f32 %v160, %v172
      %v174 = vsub.f32 1.0, %v170
      %v175 = vmul.f32 %v174, %v174
      %v176 = vmul.f32 %v173, %v175
      %v177 = vlaneseq
      %v178 = vand.u32 %v177, 127
      %179 = vset.pattern.permute.xlu0 0
      %180 = vperm.xlu0 %179, %v155
      %v181 = vpop.permute.xlu0 %180
      %vm182 = vcmp.eq.s32.totalorder %v178, %v181
      %v183 = vsel %vm182, %v176, 0.0
      %v184 = vsel %vm156, %v183, 0.0
      %185 = vadd.xlane.f32.xlu0 %v184
      %v186 = vpop.xlane.xlu0 %185
      %v187 = vsel %vm156, %v176, 0.0
      %188 = vadd.xlane.f32.xlu0 %v187
      %v189 = vpop.xlane.xlu0 %188
      %v190 = vsub.f32 %v189, %v176
      %v191 = vsub.f32 %v190, %v186
      %v192 = vmul.f32 %v191, 0.014285714
      %v193 = vmul.f32 %v186, 1.8
      %v194 = vadd.f32 %v192, %v193
      %v195 = vsub.f32 0.0, %v194
      %s196 = smul.u32 %s13, 8
      %v197 = vlaneseq
      %v198 = vshrl.u32 %v197, 7
      %v199 = vstv %s196
      %v200 = vadd.s32 %v199, %v198
      %vm201 = vcmp.lt.s32.totalorder %v200, 16
      %vm202 = vcmp.ne.s32.totalorder %v155, 0
      %vm203 = vmand %vm201, %vm202
      %v204 = vsel %vm203, %v195, 0.0
      %vm205 = vcmask 7168
      %v206 = vsel %vm205, %v204, 0.0
      %v207 = vrot.slane %v206, 4
      %v208 = vadd.f32 %v206, %v207
      %v209 = vrot.slane %v208, 2
      %v210 = vadd.f32 %v208, %v209
      %v211 = vrot.slane %v210, 1
      %v212 = vadd.f32 %v210, %v211
      %vm213 = vcmask 0
      %214 = vst.msk [vmem:[%s153] sm:$0x1] %vm213, %v212
      %p215 = scmp.lt.s32.totalorder %s13, 1
      %s216 = scalar_select %p215, %s13, 1
      %s217 = scalar_lea.vmem %s2, %s216
      // Predicated region
      $region29: #{tpu_custom_call.1} parent=27 // pred_check
        %p218 = pneg %p83
      $region30: #{tpu_custom_call.1} parent=27 // pred_check_branch
        %220 = sbr.rel (%p218) target = $region32
      $region31: #{tpu_custom_call.1} parent=27 // pred_region
        _
      $region32: #{tpu_custom_call.1} parent=27 // pred_fallthru
        _
    $region28: #{tpu_custom_call.1} parent=5 // pred_fallthru
      _
    %p221 = scmp.le.s32.totalorder 2, %s8
    // Predicated region
    $region33: #{tpu_custom_call.1} parent=5 // pred_check
      %p222 = pneg %p221
    $region34: #{tpu_custom_call.1} parent=5 // pred_check_branch
      %224 = sbr.rel (%p222) target = $region36
    $region35: #{tpu_custom_call.1} parent=5 // pred_region
      %s225 = ssub.s32 %s8, 2
      // Predicated region
      $region37: #{tpu_custom_call.1} parent=35 // pred_check
        %p226 = pneg %p89
      $region38: #{tpu_custom_call.1} parent=35 // pred_check_branch
        %228 = sbr.rel (%p226) target = $region40
      $region39: #{tpu_custom_call.1} parent=35 // pred_region
        %p229 = scmp.lt.s32.totalorder %s14, 1
        %s230 = scalar_select %p229, %s14, 1
        %s231 = scalar_lea.vmem %s2, %s230
      $region40: #{tpu_custom_call.1} parent=35 // pred_fallthru
        _
    $region36: #{tpu_custom_call.1} parent=5 // pred_fallthru
      _
  $region6: #{tpu_custom_call.1} parent=0 // loop_footer
    %s12 = sadd.s32 1, %s8
  $region7: #{tpu_custom_call.1} parent=0 // loop_footer_branch
    %7 = sbr.rel target = $region3
  $region8: #{tpu_custom_call.1} parent=0 // loop_exit
    _

</llo_original>
